<compile_context>
chip_gen: v7x
topology: tpu7x:2x2x1
jax: 0.10.0
libtpu: 0.0.40
codegen_flags: <defaults>
</compile_context>

<pallas_src>
import jax
import jax.numpy as jnp
from jax import lax
from jax.experimental import pallas as pl
from jax.experimental.pallas import tpu as pltpu

IN_FEATURES = 93
HIDDEN = 64
OUT_FEATURES = 1

TILE_B = 2048  # default batch tile (rows); shrinks automatically for small B


def _mlp_kernel(x_ref, w1_ref, b1_ref, w2_ref, b2_ref, o_ref):
    # Layer 1: (TILE_B, 93) @ (93, 64) on the MXU, f32 accumulate.
    h = jnp.dot(x_ref[...], w1_ref[...], preferred_element_type=jnp.float32)
    # Bias + ReLU on the VPU (f32).
    h = jnp.maximum(h + b1_ref[...], 0.0)
    # Layer 2 as a lane-major matvec: (1, 64) contracted with (TILE_B, 64)
    # along the feature axis -> (1, TILE_B).  Result is already lane-dense,
    # so the store below is an unmasked full-lane vst.
    y = lax.dot_general(
        w2_ref[...], h,
        dimension_numbers=(((1,), (1,)), ((), ())),
        preferred_element_type=jnp.float32,
    )
    y = y + b2_ref[...]                      # (1, TILE_B) + (1, 1) broadcast
    o_ref[...] = jax.nn.sigmoid(y).astype(o_ref.dtype)   # exp on the EUP


def _round_up(n, m):
    return pl.cdiv(n, m) * m


def my_model_forward(x, w1, b1, w2, b2, *, tile_b=None, use_bf16_inputs=False):
    """x: (B, 93) float32 -> (B, 1) float32."""
    B = x.shape[0]
    if tile_b is None:
        # Keep the tile in the 1024-4096 sweet spot, but never larger than the
        # (lane-rounded) batch so tiny batches don't waste compute.
        tile_b = min(TILE_B, _round_up(max(B, 1), 128))
    b_pad = _round_up(B, tile_b)
    num_tiles = b_pad // tile_b

    if b_pad != B:
        # Pad ragged tail; padded rows are computed and then sliced away.
        x = jnp.pad(x, ((0, b_pad - B), (0, 0)))

    if use_bf16_inputs:
        # Halves HBM traffic on the mem-bound x stream (v6e/v7x); the matmul
        # still accumulates in f32 and all elementwise math stays f32.
        x = x.astype(jnp.bfloat16)
        w1 = w1.astype(jnp.bfloat16)

    out = pl.pallas_call(
        _mlp_kernel,
        out_shape=jax.ShapeDtypeStruct((1, b_pad), jnp.float32),
        grid_spec=pl.GridSpec(
            grid=(num_tiles,),
            in_specs=[
                # Streamed, double-buffered batch tiles.
                pl.BlockSpec((tile_b, IN_FEATURES), lambda i: (i, 0)),
                # Weights / biases: constant index_map -> VMEM-resident.
                pl.BlockSpec((IN_FEATURES, HIDDEN), lambda i: (0, 0)),
                pl.BlockSpec((1, HIDDEN), lambda i: (0, 0)),
                pl.BlockSpec((OUT_FEATURES, HIDDEN), lambda i: (0, 0)),
                pl.BlockSpec((1, OUT_FEATURES), lambda i: (0, 0)),
            ],
            # Lane-dense output slab: one (1, tile_b) block per grid step.
            out_specs=pl.BlockSpec((1, tile_b), lambda i: (0, i)),
        ),
        compiler_params=pltpu.CompilerParams(
            # Batch tiles are independent -> shard across v7x's 2 TensorCores.
            dimension_semantics=("parallel",),
        ),
    )(x, w1, b1, w2, b2)

    return out[0, :B].reshape(B, OUT_FEATURES)


def init_params(key):
    """Deterministic parameter init (matches PyTorch Linear default ranges)."""
    k1, k2, k3, k4 = jax.random.split(key, 4)
    bound1 = 1.0 / jnp.sqrt(IN_FEATURES)
    bound2 = 1.0 / jnp.sqrt(HIDDEN)
    w1 = jax.random.uniform(k1, (IN_FEATURES, HIDDEN), jnp.float32, -bound1, bound1)
    b1 = jax.random.uniform(k2, (1, HIDDEN), jnp.float32, -bound1, bound1)
    w2 = jax.random.uniform(k3, (OUT_FEATURES, HIDDEN), jnp.float32, -bound2, bound2)
    b2 = jax.random.uniform(k4, (1, OUT_FEATURES), jnp.float32, -bound2, bound2)
    return w1, b1, w2, b2


def _reference(x, w1, b1, w2, b2):
    h = jnp.maximum(x @ w1 + b1, 0.0)
    return jax.nn.sigmoid(h @ w2.T + b2)


if __name__ == "__main__":
    key = jax.random.PRNGKey(0)
    kx, kp = jax.random.split(key)
    w1, b1, w2, b2 = init_params(kp)

    # Primary small-shape check (single tile; 8 rows padded up to 128).
    batch = 8
    x = jax.random.normal(kx, (batch, IN_FEATURES), jnp.float32)
    out = jax.block_until_ready(my_model_forward(x, w1, b1, w2, b2))
    ref = _reference(x, w1, b1, w2, b2)
    assert out.shape == (batch, OUT_FEATURES), out.shape
    assert jnp.allclose(out, ref, atol=1e-5, rtol=1e-5), "mismatch vs reference (batch=8)"

    # Multi-tile + ragged-tail check: 300 rows with tile_b=128 -> 3 grid steps,
    # last tile partially padded; exercises pipelining and output slicing.
    batch2 = 300
    x2 = jax.random.normal(jax.random.PRNGKey(1), (batch2, IN_FEATURES), jnp.float32)
    out2 = jax.block_until_ready(my_model_forward(x2, w1, b1, w2, b2, tile_b=128))
    ref2 = _reference(x2, w1, b1, w2, b2)
    assert out2.shape == (batch2, OUT_FEATURES), out2.shape
    assert jnp.allclose(out2, ref2, atol=1e-5, rtol=1e-5), "mismatch vs reference (batch=300)"

    print("KERNEL_OK")
</pallas_src>

<mosaic_0001>
module attributes {stable_mosaic.version = 11 : i64} {
  func.func @_mlp_kernel(%arg0: i32, %arg1: memref<128x93xf32, #tpu.memory_space<vmem>>, %arg2: memref<93x64xf32, #tpu.memory_space<vmem>>, %arg3: memref<1x64xf32, #tpu.memory_space<vmem>>, %arg4: memref<1x64xf32, #tpu.memory_space<vmem>>, %arg5: memref<1x1xf32, #tpu.memory_space<vmem>>, %arg6: memref<1x128xf32, #tpu.memory_space<vmem>>) attributes {dimension_semantics = [#tpu.dimension_semantics<parallel>], iteration_bounds = array<i64: 1>, scalar_prefetch = 0 : i64, scratch_operands = 0 : i64, tpu.core_type = #tpu.core_type<tc>, window_params = [{transform_indices = @transform_0, window_bounds = array<i64: 128, 93>}, {pipeline_mode = #tpu.pipeline_mode<synchronous>, transform_indices = @transform_1, window_bounds = array<i64: 93, 64>}, {pipeline_mode = #tpu.pipeline_mode<synchronous>, transform_indices = @transform_2, window_bounds = array<i64: 1, 64>}, {pipeline_mode = #tpu.pipeline_mode<synchronous>, transform_indices = @transform_3, window_bounds = array<i64: 1, 64>}, {pipeline_mode = #tpu.pipeline_mode<synchronous>, transform_indices = @transform_4, window_bounds = array<i64: 1, 1>}, {transform_indices = @transform_5, window_bounds = array<i64: 1, 128>}]} {
    %c0 = arith.constant 0 : index
    %c0_0 = arith.constant 0 : index
    %0 = vector.load %arg1[%c0, %c0_0] : memref<128x93xf32, #tpu.memory_space<vmem>>, vector<128x93xf32>
    %c0_1 = arith.constant 0 : index
    %c0_2 = arith.constant 0 : index
    %1 = vector.load %arg2[%c0_1, %c0_2] : memref<93x64xf32, #tpu.memory_space<vmem>>, vector<93x64xf32>
    %cst = arith.constant dense<0.000000e+00> : vector<128x64xf32>
    %2 = tpu.matmul %0, %1, %cst {dimension_numbers = #tpu.dot_dimension_numbers<[1], [0], [0], [1], [0, 0, 1, 1], [], []>} : vector<128x93xf32>, vector<93x64xf32>, vector<128x64xf32> -> vector<128x64xf32>
    %c0_3 = arith.constant 0 : index
    %c0_4 = arith.constant 0 : index
    %3 = vector.load %arg3[%c0_3, %c0_4] : memref<1x64xf32, #tpu.memory_space<vmem>>, vector<1x64xf32>
    %4 = vector.broadcast %3 : vector<1x64xf32> to vector<128x64xf32>
    %5 = arith.addf %2, %4 : vector<128x64xf32>
    %cst_5 = arith.constant 0.000000e+00 : f32
    %6 = vector.broadcast %cst_5 : f32 to vector<128x64xf32>
    %7 = arith.maximumf %5, %6 : vector<128x64xf32>
    %c0_6 = arith.constant 0 : index
    %c0_7 = arith.constant 0 : index
    %8 = vector.load %arg4[%c0_6, %c0_7] : memref<1x64xf32, #tpu.memory_space<vmem>>, vector<1x64xf32>
    %cst_8 = arith.constant dense<0.000000e+00> : vector<1x128xf32>
    %9 = tpu.matmul %8, %7, %cst_8 {dimension_numbers = #tpu.dot_dimension_numbers<[1], [1], [0], [0], [0, 0, 1, 0], [], []>} : vector<1x64xf32>, vector<128x64xf32>, vector<1x128xf32> -> vector<1x128xf32>
    %c0_9 = arith.constant 0 : index
    %c0_10 = arith.constant 0 : index
    %10 = vector.load %arg5[%c0_9, %c0_10] : memref<1x1xf32, #tpu.memory_space<vmem>>, vector<1x1xf32>
    %11 = vector.broadcast %10 : vector<1x1xf32> to vector<1x128xf32>
    %12 = arith.addf %9, %11 : vector<1x128xf32>
    %13 = arith.negf %12 : vector<1x128xf32>
    %14 = math.exp %13 : vector<1x128xf32>
    %cst_11 = arith.constant 1.000000e+00 : f32
    %15 = vector.broadcast %cst_11 : f32 to vector<1x128xf32>
    %16 = arith.addf %15, %14 : vector<1x128xf32>
    %17 = arith.divf %15, %16 : vector<1x128xf32>
    %c0_12 = arith.constant 0 : index
    %c0_13 = arith.constant 0 : index
    %18 = vector.load %arg6[%c0_12, %c0_13] : memref<1x128xf32, #tpu.memory_space<vmem>>, vector<1x128xf32>
    tpu.vector_store %arg6[%c0_12, %c0_13], %17 {strides = array<i32>} : memref<1x128xf32, #tpu.memory_space<vmem>>, vector<1x128xf32>,
    return
  }
  func.func @transform_0(%arg0: i32) -> (i32, i32) {
    %c0_i32 = arith.constant 0 : i32
    %c0_i32_0 = arith.constant 0 : i32
    return %arg0, %c0_i32 : i32, i32
  }
  func.func @transform_1(%arg0: i32) -> (i32, i32) {
    %c0_i32 = arith.constant 0 : i32
    %c0_i32_0 = arith.constant 0 : i32
    %c0_i32_1 = arith.constant 0 : i32
    return %c0_i32, %c0_i32_0 : i32, i32
  }
  func.func @transform_2(%arg0: i32) -> (i32, i32) {
    %c0_i32 = arith.constant 0 : i32
    %c0_i32_0 = arith.constant 0 : i32
    %c0_i32_1 = arith.constant 0 : i32
    return %c0_i32, %c0_i32_0 : i32, i32
  }
  func.func @transform_3(%arg0: i32) -> (i32, i32) {
    %c0_i32 = arith.constant 0 : i32
    %c0_i32_0 = arith.constant 0 : i32
    %c0_i32_1 = arith.constant 0 : i32
    return %c0_i32, %c0_i32_0 : i32, i32
  }
  func.func @transform_4(%arg0: i32) -> (i32, i32) {
    %c0_i32 = arith.constant 0 : i32
    %c0_i32_0 = arith.constant 0 : i32
    %c0_i32_1 = arith.constant 0 : i32
    return %c0_i32, %c0_i32_0 : i32, i32
  }
  func.func @transform_5(%arg0: i32) -> (i32, i32) {
    %c0_i32 = arith.constant 0 : i32
    %c0_i32_0 = arith.constant 0 : i32
    return %c0_i32, %arg0 : i32, i32
  }
}

</mosaic_0001>

<llo_original>
// kernel: tpu_custom_call.1
$region0: #{tpu_custom_call.1}
  #allocation0 [shape = 'u32[]', space=smem, size = 0x4, offset = 0x4, fixed_abs, tag = 'smem constant byte address 0x4 - core index']
  #allocation1 [shape = 'u32[144,128]{1,0:T(1,128)}', space=vmem, size = 0x12000, scoped, tag = 'internal scratch']
  #allocation2 [shape = 'f32[1,1]{1,0:T(1,128)S(1)}', space=vmem, size = 0x200, scoped, tag = 'scoped memory for tpu_custom_call.1']
  %s0 = inlined_call_operand.vmem [shape: f32[128,93], index: 0, kind: input, shape index: {}]
  %s1 = inlined_call_operand.vmem [shape: f32[93,64], index: 1, kind: input, shape index: {}]
  %s2 = inlined_call_operand.vmem [shape: f32[1,64], index: 2, kind: input, shape index: {}]
  %s3 = inlined_call_operand.vmem [shape: f32[1,64], index: 3, kind: input, shape index: {}]
  %s4 = inlined_call_operand.<no memory space> [shape: f32[1,1], index: 4, kind: input, shape index: {}]
  %s5 = inlined_call_operand.hbm [shape: f32[1,128], index: 5, kind: output, shape index: {}]
  %s6 = sld [smem:[#allocation0]]
  $region30: #{tpu_custom_call.1} parent=0
    _
  %s8 = ssub.s32 1, %s6
  %s9 = scalar_select 0, %s8, %s6
  %v10 = vstv %s4
  %11 = vst [vmem:[#allocation2] sm:$0x1] %v10
  $region1: #{tpu_custom_call.1} parent=0
    #allocation3 [shape = 'u8[512]{0}', space=vmem, size = 0x400, scoped, tag = 'output window, operand 0, single buffered']
    #allocation4 [shape = 's32[1]{0}', space=sflag, size = 0x4, scoped, tag = 'scoped memory for tpu_custom_call.1']
    %12 = vsyncpa [#allocation4], 0
    // Predicated region
    $region2: #{tpu_custom_call.1} parent=1 // pred_check
      _
    $region3: #{tpu_custom_call.1} parent=1 // pred_check_branch
      %14 = sbr.rel (0) target = $region5
    $region4: #{tpu_custom_call.1} parent=1 // pred_region
      _
    $region5: #{tpu_custom_call.1} parent=1 // pred_fallthru
      _
    // Predicated region
    $region6: #{tpu_custom_call.1} parent=1 // pred_check
      _
    $region7: #{tpu_custom_call.1} parent=1 // pred_check_branch
      %16 = sbr.rel (0) target = $region9
    $region8: #{tpu_custom_call.1} parent=1 // pred_region
      _
    $region9: #{tpu_custom_call.1} parent=1 // pred_fallthru
      _
    // Predicated region
    $region10: #{tpu_custom_call.1} parent=1 // pred_check
      _
    $region11: #{tpu_custom_call.1} parent=1 // pred_check_branch
      %18 = sbr.rel (0) target = $region13
    $region12: #{tpu_custom_call.1} parent=1 // pred_region
      _
    $region13: #{tpu_custom_call.1} parent=1 // pred_fallthru
      _
    // Predicated region
    $region14: #{tpu_custom_call.1} parent=1 // pred_check
      _
    $region15: #{tpu_custom_call.1} parent=1 // pred_check_branch
      %20 = sbr.rel (0) target = $region17
    $region16: #{tpu_custom_call.1} parent=1 // pred_region
      _
    $region17: #{tpu_custom_call.1} parent=1 // pred_fallthru
      _
    // Predicated region
    $region18: #{tpu_custom_call.1} parent=1 // pred_check
      _
    $region19: #{tpu_custom_call.1} parent=1 // pred_check_branch
      %22 = sbr.rel (0) target = $region21
    $region20: #{tpu_custom_call.1} parent=1 // pred_region
      _
    $region21: #{tpu_custom_call.1} parent=1 // pred_fallthru
      _
    %v23 = vld [vmem:[%s0] sm:$0xff]
    %v24 = vld [vmem:[%s0 + $0x8] sm:$0xff]
    %v25 = vld [vmem:[%s0 + $0x10] sm:$0xff]
    %v26 = vld [vmem:[%s0 + $0x18] sm:$0xff]
    %v27 = vld [vmem:[%s0 + $0x20] sm:$0xff]
    %v28 = vld [vmem:[%s0 + $0x28] sm:$0xff]
    %v29 = vld [vmem:[%s0 + $0x30] sm:$0xff]
    %v30 = vld [vmem:[%s0 + $0x38] sm:$0xff]
    %v31 = vld [vmem:[%s0 + $0x40] sm:$0xff]
    %v32 = vld [vmem:[%s0 + $0x48] sm:$0xff]
    %v33 = vld [vmem:[%s0 + $0x50] sm:$0xff]
    %v34 = vld [vmem:[%s0 + $0x58] sm:$0xff]
    %v35 = vld [vmem:[%s0 + $0x60] sm:$0xff]
    %v36 = vld [vmem:[%s0 + $0x68] sm:$0xff]
    %v37 = vld [vmem:[%s0 + $0x70] sm:$0xff]
    %v38 = vld [vmem:[%s0 + $0x78] sm:$0xff]
    %v39 = vld [vmem:[%s1] sm:$0xff]
    %v40 = vld [vmem:[%s1 + $0x8] sm:$0xff]
    %v41 = vld [vmem:[%s1 + $0x10] sm:$0xff]
    %v42 = vld [vmem:[%s1 + $0x18] sm:$0xff]
    %v43 = vld [vmem:[%s1 + $0x20] sm:$0xff]
    %v44 = vld [vmem:[%s1 + $0x28] sm:$0xff]
    %v45 = vld [vmem:[%s1 + $0x30] sm:$0xff]
    %v46 = vld [vmem:[%s1 + $0x38] sm:$0xff]
    %v47 = vld [vmem:[%s1 + $0x40] sm:$0xff]
    %v48 = vld [vmem:[%s1 + $0x48] sm:$0xff]
    %v49 = vld [vmem:[%s1 + $0x50] sm:$0xff]
    %v50 = vld [vmem:[%s1 + $0x58] sm:$0x1f]
    %v51 = vld [vmem:[%s2] sm:$0x1]
    %v53 = vlaneseq
    %v54 = vshrl.u32 %v53, 7
    %v55 = vsub.s32 0, %v54
    %v56 = vrot.slane %v51, %v55
    %vm58 = vcmask 760832
    %v60 = vsel %vm58, %v23, 0
    %v63 = vsel %vm58, %v24, 0
    %v66 = vsel %vm58, %v25, 0
    %v69 = vsel %vm58, %v26, 0
    %v72 = vsel %vm58, %v27, 0
    %v75 = vsel %vm58, %v28, 0
    %v78 = vsel %vm58, %v29, 0
    %v81 = vsel %vm58, %v30, 0
    %v84 = vsel %vm58, %v31, 0
    %v87 = vsel %vm58, %v32, 0
    %v90 = vsel %vm58, %v33, 0
    %v93 = vsel %vm58, %v34, 0
    %v96 = vsel %vm58, %v35, 0
    %v99 = vsel %vm58, %v36, 0
    %v102 = vsel %vm58, %v37, 0
    %v105 = vsel %vm58, %v38, 0
    %vm107 = vcmask 1044480
    %v109 = vsel %vm107, %v50, 0
    %111 = vmatprep.subr.mxu0 0.0
    %112 = vmatpush1.msra.mxu0 %v39
    %113 = vmatprep.subr.mxu0 0.0
    %114 = vmatpush1.msra.mxu0 %v40
    %115 = vmatprep.subr.mxu0 0.0
    %116 = vmatpush1.msra.mxu0 %v41
    %117 = vmatprep.subr.mxu0 0.0
    %118 = vmatpush1.msra.mxu0 %v42
    %119 = vmatprep.subr.mxu0 0.0
    %120 = vmatpush1.msra.mxu0 %v43
    %121 = vmatprep.subr.mxu0 0.0
    %122 = vmatpush1.msra.mxu0 %v44
    %123 = vmatprep.subr.mxu0 0.0
    %124 = vmatpush1.msra.mxu0 %v45
    %125 = vmatprep.subr.mxu0 0.0
    %126 = vmatpush1.msra.mxu0 %v46
    %127 = vmatprep.subr.mxu0 0.0
    %128 = vmatpush1.msra.mxu0 %v47
    %129 = vmatprep.subr.mxu0 0.0
    %130 = vmatpush1.msra.mxu0 %v48
    %131 = vmatprep.subr.mxu0 0.0
    %132 = vmatpush1.msra.mxu0 %v49
    %133 = vmatprep.subr.mxu0 0.0
    %134 = vmatpush1.msra.mxu0 %v109
    %135 = vmatprep.subr.mxu0 0.0
    %136 = vmatpush1.msra.mxu0 0.0
    %137 = vmatprep.subr.mxu0 0.0
    %138 = vmatpush1.msra.mxu0 0.0
    %139 = vmatprep.subr.mxu0 0.0
    %140 = vmatpush1.msra.mxu0 0.0
    %141 = vmatprep.subr.mxu0 0.0
    %142 = vmatpush1.msra.mxu0 0.0
    %143 = vmatprep.subr.mxu0 0.0
    %144 = vmatpush1.msra.mxu0 0.0
    %145 = vmatprep.subr.mxu0 0.0
    %146 = vmatpush1.msra.mxu0 0.0
    %147 = vmatprep.subr.mxu0 0.0
    %148 = vmatpush1.msra.mxu0 0.0
    %149 = vmatprep.subr.mxu0 0.0
    %150 = vmatpush1.msra.mxu0 0.0
    %151 = vmatprep.subr.mxu0 0.0
    %152 = vmatpush1.msra.mxu0 0.0
    %153 = vmatprep.subr.mxu0 0.0
    %154 = vmatpush1.msra.mxu0 0.0
    %155 = vmatprep.subr.mxu0 0.0
    %156 = vmatpush1.msra.mxu0 0.0
    %157 = vmatprep.subr.mxu0 0.0
    %158 = vmatpush1.msra.mxu0 0.0
    %159 = vmatprep.subr.mxu0 0.0
    %160 = vmatpush1.msra.mxu0 0.0
    %161 = vmatprep.subr.mxu0 0.0
    %162 = vmatpush1.msra.mxu0 0.0
    %163 = vmatprep.subr.mxu0 0.0
    %164 = vmatpush1.msra.mxu0 0.0
    %165 = vmatprep.subr.mxu0 0.0
    %166 = vmatpush1.msra.mxu0 0.0
    %167 = vmatprep.subr.mxu0 0.0
    %168 = vmatpush1.msra.mxu0 0.0
    %169 = vmatprep.subr.mxu0 0.0
    %170 = vmatpush1.msra.mxu0 0.0
    %171 = vmatprep.subr.mxu0 0.0
    %172 = vmatpush1.msra.mxu0 0.0
    %173 = vmatprep.subr.mxu0 0.0
    %174 = vmatpush1.msra.mxu0 0.0
    %175 = vmatprep.mubr.f32.mxu0 0.0
    %176 = vmatmul.mubr.f32.gmra.mrb[0].mxu0 %v60
    %v177 = vpop.f32.mrb[0].mxu0
    %v178 = vadd.f32 %v56, %v177
    %v179 = vpop.f32.mrb[0].mxu0
    %180 = vmatprep.mubr.f32.mxu0 0.0
    %181 = vmatmul.mubr.f32.gmra.mrb[0].mxu0 %v63
    %v182 = vpop.f32.mrb[0].mxu0
    %v183 = vadd.f32 %v56, %v182
    %v184 = vpop.f32.mrb[0].mxu0
    %185 = vmatprep.mubr.f32.mxu0 0.0
    %186 = vmatmul.mubr.f32.gmra.mrb[0].mxu0 %v66
    %v187 = vpop.f32.mrb[0].mxu0
    %v188 = vadd.f32 %v56, %v187
    %v189 = vpop.f32.mrb[0].mxu0
    %190 = vmatprep.mubr.f32.mxu0 0.0
    %191 = vmatmul.mubr.f32.gmra.mrb[0].mxu0 %v69
    %v192 = vpop.f32.mrb[0].mxu0
    %v193 = vadd.f32 %v56, %v192
    %v194 = vpop.f32.mrb[0].mxu0
    %195 = vmatprep.mubr.f32.mxu0 0.0
    %196 = vmatmul.mubr.f32.gmra.mrb[0].mxu0 %v72
    %v197 = vpop.f32.mrb[0].mxu0
    %v198 = vadd.f32 %v56, %v197
    %v199 = vpop.f32.mrb[0].mxu0
    %200 = vmatprep.mubr.f32.mxu0 0.0
    %201 = vmatmul.mubr.f32.gmra.mrb[0].mxu0 %v75
    %v202 = vpop.f32.mrb[0].mxu0
    %v203 = vadd.f32 %v56, %v202
    %v204 = vpop.f32.mrb[0].mxu0
    %205 = vmatprep.mubr.f32.mxu0 0.0
    %206 = vmatmul.mubr.f32.gmra.mrb[0].mxu0 %v78
    %v207 = vpop.f32.mrb[0].mxu0
    %v208 = vadd.f32 %v56, %v207
    %v209 = vpop.f32.mrb[0].mxu0
    %210 = vmatprep.mubr.f32.mxu0 0.0
    %211 = vmatmul.mubr.f32.gmra.mrb[0].mxu0 %v81
    %v212 = vpop.f32.mrb[0].mxu0
    %v213 = vadd.f32 %v56, %v212
    %v214 = vpop.f32.mrb[0].mxu0
    %215 = vmatprep.mubr.f32.mxu0 0.0
    %216 = vmatmul.mubr.f32.gmra.mrb[0].mxu0 %v84
    %v217 = vpop.f32.mrb[0].mxu0
    %v218 = vadd.f32 %v56, %v217
    %v219 = vpop.f32.mrb[0].mxu0
    %220 = vmatprep.mubr.f32.mxu0 0.0
    %221 = vmatmul.mubr.f32.gmra.mrb[0].mxu0 %v87
    %v222 = vpop.f32.mrb[0].mxu0
    %v223 = vadd.f32 %v56, %v222
    %v224 = vpop.f32.mrb[0].mxu0
    %225 = vmatprep.mubr.f32.mxu0 0.0
    %226 = vmatmul.mubr.f32.gmra.mrb[0].mxu0 %v90
    %v227 = vpop.f32.mrb[0].mxu0
    %v228 = vadd.f32 %v56, %v227
    %v229 = vpop.f32.mrb[0].mxu0
    %230 = vmatprep.mubr.f32.mxu0 0.0
    %231 = vmatmul.mubr.f32.gmra.mrb[0].mxu0 %v93
    %v232 = vpop.f32.mrb[0].mxu0
    %v233 = vadd.f32 %v56, %v232
    %v234 = vpop.f32.mrb[0].mxu0
    %235 = vmatprep.mubr.f32.mxu0 0.0
    %236 = vmatmul.mubr.f32.gmra.mrb[0].mxu0 %v96
    %v237 = vpop.f32.mrb[0].mxu0
    %v238 = vadd.f32 %v56, %v237
    %v239 = vpop.f32.mrb[0].mxu0
    %240 = vmatprep.mubr.f32.mxu0 0.0
    %241 = vmatmul.mubr.f32.gmra.mrb[0].mxu0 %v99
    %v242 = vpop.f32.mrb[0].mxu0
    %v243 = vadd.f32 %v56, %v242
    %v244 = vpop.f32.mrb[0].mxu0
    %245 = vmatprep.mubr.f32.mxu0 0.0
    %246 = vmatmul.mubr.f32.gmra.mrb[0].mxu0 %v102
    %v247 = vpop.f32.mrb[0].mxu0
    %v248 = vadd.f32 %v56, %v247
    %v249 = vpop.f32.mrb[0].mxu0
    %250 = vmatprep.mubr.f32.mxu0 0.0
    %251 = vmatmul.mubr.f32.gmra.mrb[0].mxu0 %v105
    %v252 = vpop.f32.mrb[0].mxu0
    %v253 = vadd.f32 %v56, %v252
    %v254 = vpop.f32.mrb[0].mxu0
    %255 = vdwg.mxu0
    %v256 = vmax.f32 %v178, 0.0
    %v257 = vmax.f32 %v183, 0.0
    %v258 = vmax.f32 %v188, 0.0
    %v259 = vmax.f32 %v193, 0.0
    %v260 = vmax.f32 %v198, 0.0
    %v261 = vmax.f32 %v203, 0.0
    %v262 = vmax.f32 %v208, 0.0
    %v263 = vmax.f32 %v213, 0.0
    %v264 = vmax.f32 %v218, 0.0
    %v265 = vmax.f32 %v223, 0.0
    %v266 = vmax.f32 %v228, 0.0
    %v267 = vmax.f32 %v233, 0.0
    %v268 = vmax.f32 %v238, 0.0
    %v269 = vmax.f32 %v243, 0.0
    %v270 = vmax.f32 %v248, 0.0
    %v271 = vmax.f32 %v253, 0.0
    %v272 = vld [vmem:[%s3] sm:$0x1]
    %v273 = vld [vmem:[#allocation2] sm:$0x1]
    %275 = vset.pattern.permute.xlu0 0
    %276 = vperm.xlu0 %275, %v273
    %v277 = vpop.permute.xlu0 %276
    %v279 = vlaneseq
    %v280 = vshrl.u32 %v279, 7
    %v281 = vsub.s32 0, %v280
    %v282 = vrot.slane %v277, %v281
    %vm283 = vcmask 523264
    %v285 = vsel %vm283, %v272, 0
    %v288 = vsel %vm283, %v256, 0
    %v291 = vsel %vm283, %v257, 0
    %v294 = vsel %vm283, %v258, 0
    %v297 = vsel %vm283, %v259, 0
    %v300 = vsel %vm283, %v260, 0
    %v303 = vsel %vm283, %v261, 0
    %v306 = vsel %vm283, %v262, 0
    %v309 = vsel %vm283, %v263, 0
    %v312 = vsel %vm283, %v264, 0
    %v315 = vsel %vm283, %v265, 0
    %v318 = vsel %vm283, %v266, 0
    %v321 = vsel %vm283, %v267, 0
    %v324 = vsel %vm283, %v268, 0
    %v327 = vsel %vm283, %v269, 0
    %v330 = vsel %vm283, %v270, 0
    %v333 = vsel %vm283, %v271, 0
    %335 = vmatprep.subr.mxu0 0.0
    %336 = vmatpush1.xpose.msra.mxu0 %v288
    %337 = vmatprep.subr.mxu0 0.0
    %338 = vmatpush1.xpose.msra.mxu0 %v291
    %339 = vmatprep.subr.mxu0 0.0
    %340 = vmatpush1.xpose.msra.mxu0 %v294
    %341 = vmatprep.subr.mxu0 0.0
    %342 = vmatpush1.xpose.msra.mxu0 %v297
    %343 = vmatprep.subr.mxu0 0.0
    %344 = vmatpush1.xpose.msra.mxu0 %v300
    %345 = vmatprep.subr.mxu0 0.0
    %346 = vmatpush1.xpose.msra.mxu0 %v303
    %347 = vmatprep.subr.mxu0 0.0
    %348 = vmatpush1.xpose.msra.mxu0 %v306
    %349 = vmatprep.subr.mxu0 0.0
    %350 = vmatpush1.xpose.msra.mxu0 %v309
    %351 = vmatprep.subr.mxu0 0.0
    %352 = vmatpush1.xpose.msra.mxu0 %v312
    %353 = vmatprep.subr.mxu0 0.0
    %354 = vmatpush1.xpose.msra.mxu0 %v315
    %355 = vmatprep.subr.mxu0 0.0
    %356 = vmatpush1.xpose.msra.mxu0 %v318
    %357 = vmatprep.subr.mxu0 0.0
    %358 = vmatpush1.xpose.msra.mxu0 %v321
    %359 = vmatprep.subr.mxu0 0.0
    %360 = vmatpush1.xpose.msra.mxu0 %v324
    %361 = vmatprep.subr.mxu0 0.0
    %362 = vmatpush1.xpose.msra.mxu0 %v327
    %363 = vmatprep.subr.mxu0 0.0
    %364 = vmatpush1.xpose.msra.mxu0 %v330
    %365 = vmatprep.subr.mxu0 0.0
    %366 = vmatpush1.xpose.msra.mxu0 %v333
    %367 = vmatprep.subr.mxu0 0.0
    %368 = vmatpush1.xpose.msra.mxu0 0.0
    %369 = vmatprep.subr.mxu0 0.0
    %370 = vmatpush1.xpose.msra.mxu0 0.0
    %371 = vmatprep.subr.mxu0 0.0
    %372 = vmatpush1.xpose.msra.mxu0 0.0
    %373 = vmatprep.subr.mxu0 0.0
    %374 = vmatpush1.xpose.msra.mxu0 0.0
    %375 = vmatprep.subr.mxu0 0.0
    %376 = vmatpush1.xpose.msra.mxu0 0.0
    %377 = vmatprep.subr.mxu0 0.0
    %378 = vmatpush1.xpose.msra.mxu0 0.0
    %379 = vmatprep.subr.mxu0 0.0
    %380 = vmatpush1.xpose.msra.mxu0 0.0
    %381 = vmatprep.subr.mxu0 0.0
    %382 = vmatpush1.xpose.msra.mxu0 0.0
    %383 = vmatprep.subr.mxu0 0.0
    %384 = vmatpush1.xpose.msra.mxu0 0.0
    %385 = vmatprep.subr.mxu0 0.0
    %386 = vmatpush1.xpose.msra.mxu0 0.0
    %387 = vmatprep.subr.mxu0 0.0
    %388 = vmatpush1.xpose.msra.mxu0 0.0
    %389 = vmatprep.subr.mxu0 0.0
    %390 = vmatpush1.xpose.msra.mxu0 0.0
    %391 = vmatprep.subr.mxu0 0.0
    %392 = vmatpush1.xpose.msra.mxu0 0.0
    %393 = vmatprep.subr.mxu0 0.0
    %394 = vmatpush1.xpose.msra.mxu0 0.0
    %395 = vmatprep.subr.mxu0 0.0
    %396 = vmatpush1.xpose.msra.mxu0 0.0
    %397 = vmatprep.subr.mxu0 0.0
    %398 = vmatpush1.xpose.msra.mxu0 0.0
    %399 = vmatprep.mubr.f32.mxu0 0.0
    %400 = vmatmul.mubr.f32.gmra.mrb[0].mxu0 %v285
    %v401 = vpop.f32.mrb[0].mxu0
    %v402 = vadd.f32 %v282, %v401
    %v403 = vpop.f32.mrb[0].mxu0
    %404 = vdwg.mxu0
    %v405 = vxor.u32 %v402, 2147483648
    %v406 = vmul.f32 %v405, 1.442695
    %v407 = vpow.pop %v406
    %v408 = vadd.f32 %v407, 1.0
    %v409 = vrcp.pop %v408
    %v410 = vmul.f32 1.0, %v409
    %411 = vst [vmem:[#allocation3] sm:$0x1] %v410
    // Predicated region
    $region22: #{tpu_custom_call.1} parent=1 // pred_check
      _
    $region23: #{tpu_custom_call.1} parent=1 // pred_check_branch
      %413 = sbr.rel (0) target = $region25
    $region24: #{tpu_custom_call.1} parent=1 // pred_region
      %s415 = ssub.s32 16, 16
      %416 = vsyncadd [#allocation4], %s415
      %s418 = sshll.u32 [#allocation3], 4
      %s419 = int_to_ptr.vmem [resolvable:$true] %s418
      %421 = dma.vmem_to_hbm [thread:$0]  %s419, 16, %s5, [#allocation4]
    $region25: #{tpu_custom_call.1} parent=1 // pred_fallthru
      _
    // Predicated region
    $region26: #{tpu_custom_call.1} parent=1 // pred_check
      _
    $region27: #{tpu_custom_call.1} parent=1 // pred_check_branch
      %423 = sbr.rel (0) target = $region29
    $region28: #{tpu_custom_call.1} parent=1 // pred_region
      %424 = dma.done [#allocation4], 16
    $region29: #{tpu_custom_call.1} parent=1 // pred_fallthru
      _
    %425 = vsyncpa [#allocation4], 1

</llo_original>
